<compile_context>
chip_gen: v7x
topology: tpu7x:2x2x1
jax: 0.10.0
libtpu: 0.0.40
codegen_flags: <defaults>
</compile_context>

<pallas_src>
import functools

import jax
import jax.numpy as jnp
from jax import lax
from jax.experimental import pallas as pl
from jax.experimental.pallas import tpu as pltpu


def _groupfc_kernel(x_ref, w_ref, b_ref, o_ref, acc_ref, *, gt, ng):
    # x_ref : (B, Gt, Kt)    activations for Gt groups, one K tile
    # w_ref : (Gt, Ng, Kt)   weights in natural K-last layout (dense HBM reads)
    # b_ref : (1, Gt*Ng)     bias (f32)
    # o_ref : (B, Gt*Ng)     lane-dense output slab of the (B, C_out) result
    # acc_ref: (B, Gt*Ng)    f32 accumulator carried across the K grid axis
    k_step = pl.program_id(1)

    @pl.when(k_step == 0)
    def _init():
        acc_ref[...] = jnp.zeros_like(acc_ref)

    # Block-diagonal grouped contraction: one MXU matmul per group in this tile.
    for g in range(gt):
        part = lax.dot_general(
            x_ref[:, g, :],                       # (B, Kt)
            w_ref[g],                             # (Ng, Kt)
            dimension_numbers=(((1,), (1,)), ((), ())),  # contract K (last dims)
            preferred_element_type=jnp.float32,
        )                                         # (B, Ng) f32
        acc_ref[:, g * ng:(g + 1) * ng] += part

    @pl.when(k_step == pl.num_programs(1) - 1)
    def _finalize():
        o_ref[...] = (acc_ref[...] + b_ref[...]).astype(o_ref.dtype)


def _pick_k_tile(K, max_kt=2048):
    """K elements contracted per grid step (divisor of K, multiple of 128)."""
    if K <= max_kt:
        return K
    kt = max_kt - (max_kt % 128)
    while kt >= 128:
        if K % kt == 0:
            return kt
        kt -= 128
    return K  # fallback: no K tiling


def _pick_group_tile(G, Ng, B, Kt, itemsize, budget_bytes=8 * 1024 * 1024):
    """Groups handled per grid step.

    Prefer tiles where (when Gt < G) the sublane extent Gt is a multiple of 8 and the
    output lane width Gt*Ng is a multiple of 128 (lane-dense stores, legal blocks),
    that fit a per-step VMEM budget, and that leave >= 2 grid steps so both v7x
    TensorCores get work.  Fall back to all groups in one step.
    """
    def tile_bytes(gt):
        return (B * gt * Kt + gt * Ng * Kt) * itemsize

    candidates = []
    for gt in range(G, 0, -1):           # decreasing
        if G % gt:
            continue
        if gt != G and (gt % 8 != 0 or (gt * Ng) % 128 != 0):
            continue
        candidates.append(gt)

    fitting = [gt for gt in candidates if tile_bytes(gt) <= budget_bytes]
    pool = fitting if fitting else candidates
    multi = [gt for gt in pool if G // gt >= 2]
    if multi:
        return multi[0]                  # largest fitting tile with >= 2 grid steps
    return pool[0]


def group_fc(x, weight, bias, group_num, view=True,
             compute_dtype=jnp.bfloat16, max_k_tile=2048):
    """Grouped FC forward.  x: (B, C_in, H, W); weight: (C_out, C_in//G, H, W); bias: (C_out,)."""
    B, C_in, H, W = x.shape
    C_out = weight.shape[0]
    G = group_num
    Cg = C_in // G
    Ng = C_out // G
    K = Cg * H * W
    out_dtype = x.dtype
    if compute_dtype is None:
        compute_dtype = x.dtype

    # Pure reshapes (contiguous-dim merges -> free; no extra HBM transpose passes),
    # plus the bf16 cast at the boundary for MXU-friendly matmuls.
    x_r = x.reshape(B, G, K).astype(compute_dtype)          # (B, G, K), K lane-dense
    w_r = weight.reshape(G, Ng, K).astype(compute_dtype)    # (G, Ng, K), K lane-dense
    b_r = bias.reshape(1, C_out).astype(jnp.float32)        # (1, C_out)

    itemsize = jnp.dtype(compute_dtype).itemsize
    Kt = _pick_k_tile(K, max_kt=max_k_tile)
    Gt = _pick_group_tile(G, Ng, B, Kt, itemsize)
    grid = (G // Gt, K // Kt)

    kernel = functools.partial(_groupfc_kernel, gt=Gt, ng=Ng)

    # Rough VMEM need: double-buffered in/out tiles + f32 accumulator (+1 MiB slack).
    in_tile_bytes = (B * Gt * Kt + Gt * Ng * Kt) * itemsize
    out_tile_bytes = B * Gt * Ng * jnp.dtype(out_dtype).itemsize + Gt * Ng * 4
    acc_bytes = B * Gt * Ng * 4
    needed = 2 * (in_tile_bytes + out_tile_bytes) + acc_bytes + (1 << 20)

    compiler_kwargs = dict(dimension_semantics=("parallel", "arbitrary"))
    if needed > 32 * 1024 * 1024:
        compiler_kwargs["vmem_limit_bytes"] = int(min(needed, 96 * 1024 * 1024))

    out = pl.pallas_call(
        kernel,
        out_shape=jax.ShapeDtypeStruct((B, C_out), out_dtype),
        grid=grid,
        in_specs=[
            pl.BlockSpec((B, Gt, Kt), lambda g, k: (0, g, k)),
            pl.BlockSpec((Gt, Ng, Kt), lambda g, k: (g, 0, k)),
            pl.BlockSpec((1, Gt * Ng), lambda g, k: (0, g)),
        ],
        out_specs=pl.BlockSpec((B, Gt * Ng), lambda g, k: (0, g)),
        scratch_shapes=[pltpu.VMEM((B, Gt * Ng), jnp.float32)],
        compiler_params=pltpu.CompilerParams(**compiler_kwargs),
    )(x_r, w_r, b_r)

    if view:
        return out
    # non-view mode matches the Conv2d output shape (B, C_out, 1, 1)
    return out.reshape(B, C_out, 1, 1)


def _reference(x, weight, bias, group_num, compute_dtype=jnp.bfloat16):
    B, C_in, H, W = x.shape
    C_out = weight.shape[0]
    G = group_num
    Ng = C_out // G
    K = (C_in // G) * H * W
    xg = x.reshape(B, G, K).astype(compute_dtype)
    wg = weight.reshape(G, Ng, K).astype(compute_dtype)
    out = jnp.einsum("bgk,gnk->bgn", xg, wg,
                     preferred_element_type=jnp.float32).reshape(B, C_out)
    return (out + bias[None, :].astype(jnp.float32)).astype(x.dtype)


if __name__ == "__main__":
    # Small shapes consistent with the module: input_shape=(C_in, H, W), group_num=4.
    B, C_in, H, W = 2, 8, 16, 16
    C_out, G = 16, 4

    key = jax.random.PRNGKey(0)
    kx, kw, kb = jax.random.split(key, 3)
    x = jax.random.normal(kx, (B, C_in, H, W), dtype=jnp.float32)
    weight = jax.random.normal(kw, (C_out, C_in // G, H, W), dtype=jnp.float32) * 0.05
    bias = jax.random.normal(kb, (C_out,), dtype=jnp.float32) * 0.05

    ref = _reference(x, weight, bias, group_num=G)

    # Default path (single K step for these shapes).
    out = group_fc(x, weight, bias, group_num=G, view=True)
    out = jax.block_until_ready(out)
    assert out.shape == (B, C_out), out.shape
    assert jnp.allclose(out, ref, atol=2e-2, rtol=2e-2), "mismatch vs reference"

    # Force K tiling (2 reduction steps) to exercise the accumulator path.
    out_kt = group_fc(x, weight, bias, group_num=G, view=True, max_k_tile=256)
    out_kt = jax.block_until_ready(out_kt)
    assert jnp.allclose(out_kt, ref, atol=2e-2, rtol=2e-2), "mismatch (K-tiled) vs reference"

    # Non-view mode matches Conv2d output shape.
    out4 = group_fc(x, weight, bias, group_num=G, view=False)
    out4 = jax.block_until_ready(out4)
    assert out4.shape == (B, C_out, 1, 1), out4.shape

    print("KERNEL_OK")
</pallas_src>

<mosaic_0001>
module attributes {stable_mosaic.version = 11 : i64} {
  func.func @_groupfc_kernel(%arg0: i32, %arg1: i32, %arg2: memref<2x4x512xbf16, #tpu.memory_space<vmem>>, %arg3: memref<4x4x512xbf16, #tpu.memory_space<vmem>>, %arg4: memref<1x16xf32, #tpu.memory_space<vmem>>, %arg5: memref<2x16xf32, #tpu.memory_space<vmem>>, %arg6: memref<2x16xf32, #tpu.memory_space<vmem>>) attributes {dimension_semantics = [#tpu.dimension_semantics<parallel>, #tpu.dimension_semantics<arbitrary>], iteration_bounds = array<i64: 1, 1>, scalar_prefetch = 0 : i64, scratch_operands = 1 : i64, tpu.core_type = #tpu.core_type<tc>, window_params = [{transform_indices = @transform_0, window_bounds = array<i64: 2, 4, 512>}, {transform_indices = @transform_1, window_bounds = array<i64: 4, 4, 512>}, {transform_indices = @transform_2, window_bounds = array<i64: 1, 16>}, {transform_indices = @transform_3, window_bounds = array<i64: 2, 16>}]} {
    %c0_i32 = arith.constant 0 : i32
    %0 = arith.cmpi eq, %arg1, %c0_i32 : i32
    %1 = arith.extui %0 : i1 to i32
    %c0_i32_0 = arith.constant 0 : i32
    %2 = arith.cmpi ne, %1, %c0_i32_0 : i32
    scf.if %2 {
      %cst_39 = arith.constant 0.000000e+00 : f32
      %38 = vector.broadcast %cst_39 : f32 to vector<2x16xf32>
      %c0_40 = arith.constant 0 : index
      %c0_41 = arith.constant 0 : index
      %39 = vector.load %arg6[%c0_40, %c0_41] : memref<2x16xf32, #tpu.memory_space<vmem>>, vector<2x16xf32>
      tpu.vector_store %arg6[%c0_40, %c0_41], %38 {strides = array<i32>} : memref<2x16xf32, #tpu.memory_space<vmem>>, vector<2x16xf32>,
    } else {
    }
    %c0 = arith.constant 0 : index
    %c0_1 = arith.constant 0 : index
    %c0_2 = arith.constant 0 : index
    %3 = vector.load %arg2[%c0, %c0_1, %c0_2] : memref<2x4x512xbf16, #tpu.memory_space<vmem>>, vector<2x1x512xbf16>
    %4 = vector.shape_cast %3 : vector<2x1x512xbf16> to vector<2x512xbf16>
    %c0_3 = arith.constant 0 : index
    %c0_4 = arith.constant 0 : index
    %c0_5 = arith.constant 0 : index
    %5 = vector.load %arg3[%c0_3, %c0_4, %c0_5] : memref<4x4x512xbf16, #tpu.memory_space<vmem>>, vector<1x4x512xbf16>
    %6 = vector.shape_cast %5 : vector<1x4x512xbf16> to vector<4x512xbf16>
    %cst = arith.constant dense<0.000000e+00> : vector<2x4xf32>
    %7 = tpu.matmul %4, %6, %cst {dimension_numbers = #tpu.dot_dimension_numbers<[1], [1], [0], [0], [0, 0, 1, 0], [], []>} : vector<2x512xbf16>, vector<4x512xbf16>, vector<2x4xf32> -> vector<2x4xf32>
    %c0_6 = arith.constant 0 : index
    %c0_7 = arith.constant 0 : index
    %8 = vector.load %arg6[%c0_6, %c0_7] : memref<2x16xf32, #tpu.memory_space<vmem>>, vector<2x4xf32>
    %9 = arith.addf %8, %7 : vector<2x4xf32>
    %c0_8 = arith.constant 0 : index
    %c0_9 = arith.constant 0 : index
    %10 = vector.load %arg6[%c0_8, %c0_9] : memref<2x16xf32, #tpu.memory_space<vmem>>, vector<2x4xf32>
    tpu.vector_store %arg6[%c0_8, %c0_9], %9 {strides = array<i32>} : memref<2x16xf32, #tpu.memory_space<vmem>>, vector<2x4xf32>,
    %c0_10 = arith.constant 0 : index
    %c1 = arith.constant 1 : index
    %c0_11 = arith.constant 0 : index
    %11 = vector.load %arg2[%c0_10, %c1, %c0_11] : memref<2x4x512xbf16, #tpu.memory_space<vmem>>, vector<2x1x512xbf16>
    %12 = vector.shape_cast %11 : vector<2x1x512xbf16> to vector<2x512xbf16>
    %c1_12 = arith.constant 1 : index
    %c0_13 = arith.constant 0 : index
    %c0_14 = arith.constant 0 : index
    %13 = vector.load %arg3[%c1_12, %c0_13, %c0_14] : memref<4x4x512xbf16, #tpu.memory_space<vmem>>, vector<1x4x512xbf16>
    %14 = vector.shape_cast %13 : vector<1x4x512xbf16> to vector<4x512xbf16>
    %cst_15 = arith.constant dense<0.000000e+00> : vector<2x4xf32>
    %15 = tpu.matmul %12, %14, %cst_15 {dimension_numbers = #tpu.dot_dimension_numbers<[1], [1], [0], [0], [0, 0, 1, 0], [], []>} : vector<2x512xbf16>, vector<4x512xbf16>, vector<2x4xf32> -> vector<2x4xf32>
    %c0_16 = arith.constant 0 : index
    %c4 = arith.constant 4 : index
    %16 = vector.load %arg6[%c0_16, %c4] : memref<2x16xf32, #tpu.memory_space<vmem>>, vector<2x4xf32>
    %17 = arith.addf %16, %15 : vector<2x4xf32>
    %c0_17 = arith.constant 0 : index
    %c4_18 = arith.constant 4 : index
    %18 = vector.load %arg6[%c0_17, %c4_18] : memref<2x16xf32, #tpu.memory_space<vmem>>, vector<2x4xf32>
    tpu.vector_store %arg6[%c0_17, %c4_18], %17 {strides = array<i32>} : memref<2x16xf32, #tpu.memory_space<vmem>>, vector<2x4xf32>,
    %c0_19 = arith.constant 0 : index
    %c2 = arith.constant 2 : index
    %c0_20 = arith.constant 0 : index
    %19 = vector.load %arg2[%c0_19, %c2, %c0_20] : memref<2x4x512xbf16, #tpu.memory_space<vmem>>, vector<2x1x512xbf16>
    %20 = vector.shape_cast %19 : vector<2x1x512xbf16> to vector<2x512xbf16>
    %c2_21 = arith.constant 2 : index
    %c0_22 = arith.constant 0 : index
    %c0_23 = arith.constant 0 : index
    %21 = vector.load %arg3[%c2_21, %c0_22, %c0_23] : memref<4x4x512xbf16, #tpu.memory_space<vmem>>, vector<1x4x512xbf16>
    %22 = vector.shape_cast %21 : vector<1x4x512xbf16> to vector<4x512xbf16>
    %cst_24 = arith.constant dense<0.000000e+00> : vector<2x4xf32>
    %23 = tpu.matmul %20, %22, %cst_24 {dimension_numbers = #tpu.dot_dimension_numbers<[1], [1], [0], [0], [0, 0, 1, 0], [], []>} : vector<2x512xbf16>, vector<4x512xbf16>, vector<2x4xf32> -> vector<2x4xf32>
    %c0_25 = arith.constant 0 : index
    %c8 = arith.constant 8 : index
    %24 = vector.load %arg6[%c0_25, %c8] : memref<2x16xf32, #tpu.memory_space<vmem>>, vector<2x4xf32>
    %25 = arith.addf %24, %23 : vector<2x4xf32>
    %c0_26 = arith.constant 0 : index
    %c8_27 = arith.constant 8 : index
    %26 = vector.load %arg6[%c0_26, %c8_27] : memref<2x16xf32, #tpu.memory_space<vmem>>, vector<2x4xf32>
    tpu.vector_store %arg6[%c0_26, %c8_27], %25 {strides = array<i32>} : memref<2x16xf32, #tpu.memory_space<vmem>>, vector<2x4xf32>,
    %c0_28 = arith.constant 0 : index
    %c3 = arith.constant 3 : index
    %c0_29 = arith.constant 0 : index
    %27 = vector.load %arg2[%c0_28, %c3, %c0_29] : memref<2x4x512xbf16, #tpu.memory_space<vmem>>, vector<2x1x512xbf16>
    %28 = vector.shape_cast %27 : vector<2x1x512xbf16> to vector<2x512xbf16>
    %c3_30 = arith.constant 3 : index
    %c0_31 = arith.constant 0 : index
    %c0_32 = arith.constant 0 : index
    %29 = vector.load %arg3[%c3_30, %c0_31, %c0_32] : memref<4x4x512xbf16, #tpu.memory_space<vmem>>, vector<1x4x512xbf16>
    %30 = vector.shape_cast %29 : vector<1x4x512xbf16> to vector<4x512xbf16>
    %cst_33 = arith.constant dense<0.000000e+00> : vector<2x4xf32>
    %31 = tpu.matmul %28, %30, %cst_33 {dimension_numbers = #tpu.dot_dimension_numbers<[1], [1], [0], [0], [0, 0, 1, 0], [], []>} : vector<2x512xbf16>, vector<4x512xbf16>, vector<2x4xf32> -> vector<2x4xf32>
    %c0_34 = arith.constant 0 : index
    %c12 = arith.constant 12 : index
    %32 = vector.load %arg6[%c0_34, %c12] : memref<2x16xf32, #tpu.memory_space<vmem>>, vector<2x4xf32>
    %33 = arith.addf %32, %31 : vector<2x4xf32>
    %c0_35 = arith.constant 0 : index
    %c12_36 = arith.constant 12 : index
    %34 = vector.load %arg6[%c0_35, %c12_36] : memref<2x16xf32, #tpu.memory_space<vmem>>, vector<2x4xf32>
    tpu.vector_store %arg6[%c0_35, %c12_36], %33 {strides = array<i32>} : memref<2x16xf32, #tpu.memory_space<vmem>>, vector<2x4xf32>,
    %c0_i32_37 = arith.constant 0 : i32
    %35 = arith.cmpi eq, %arg1, %c0_i32_37 : i32
    %36 = arith.extui %35 : i1 to i32
    %c0_i32_38 = arith.constant 0 : i32
    %37 = arith.cmpi ne, %36, %c0_i32_38 : i32
    scf.if %37 {
      %c0_39 = arith.constant 0 : index
      %c0_40 = arith.constant 0 : index
      %38 = vector.load %arg6[%c0_39, %c0_40] : memref<2x16xf32, #tpu.memory_space<vmem>>, vector<2x16xf32>
      %c0_41 = arith.constant 0 : index
      %c0_42 = arith.constant 0 : index
      %39 = vector.load %arg4[%c0_41, %c0_42] : memref<1x16xf32, #tpu.memory_space<vmem>>, vector<1x16xf32>
      %40 = vector.broadcast %39 : vector<1x16xf32> to vector<2x16xf32>
      %41 = arith.addf %38, %40 : vector<2x16xf32>
      %c0_43 = arith.constant 0 : index
      %c0_44 = arith.constant 0 : index
      %42 = vector.load %arg5[%c0_43, %c0_44] : memref<2x16xf32, #tpu.memory_space<vmem>>, vector<2x16xf32>
      tpu.vector_store %arg5[%c0_43, %c0_44], %41 {strides = array<i32>} : memref<2x16xf32, #tpu.memory_space<vmem>>, vector<2x16xf32>,
    } else {
    }
    return
  }
  func.func @transform_0(%arg0: i32, %arg1: i32) -> (i32, i32, i32) {
    %c0_i32 = arith.constant 0 : i32
    %c0_i32_0 = arith.constant 0 : i32
    return %c0_i32, %arg0, %arg1 : i32, i32, i32
  }
  func.func @transform_1(%arg0: i32, %arg1: i32) -> (i32, i32, i32) {
    %c0_i32 = arith.constant 0 : i32
    %c0_i32_0 = arith.constant 0 : i32
    return %arg0, %c0_i32, %arg1 : i32, i32, i32
  }
  func.func @transform_2(%arg0: i32, %arg1: i32) -> (i32, i32) {
    %c0_i32 = arith.constant 0 : i32
    %c0_i32_0 = arith.constant 0 : i32
    return %c0_i32, %arg0 : i32, i32
  }
  func.func @transform_3(%arg0: i32, %arg1: i32) -> (i32, i32) {
    %c0_i32 = arith.constant 0 : i32
    %c0_i32_0 = arith.constant 0 : i32
    return %c0_i32, %arg0 : i32, i32
  }
}

</mosaic_0001>

<llo_original>
// kernel: tpu_custom_call.1
$region0: #{tpu_custom_call.1}
  #allocation0 [shape = 'u32[]', space=smem, size = 0x4, offset = 0x4, fixed_abs, tag = 'smem constant byte address 0x4 - core index']
  #allocation1 [shape = 'u32[144,128]{1,0:T(1,128)}', space=vmem, size = 0x12000, scoped, tag = 'internal scratch']
  #allocation2 [shape = 'f32[2,16]{1,0:T(2,128)}', space=vmem, size = 0x400, scoped, tag = 'scratch operand']
  %s0 = inlined_call_operand.hbm [shape: bf16[2,4,512], index: 0, kind: input, shape index: {}]
  %s1 = inlined_call_operand.hbm [shape: bf16[4,4,512], index: 1, kind: input, shape index: {}]
  %s2 = inlined_call_operand.vmem [shape: f32[1,16], index: 2, kind: input, shape index: {}]
  %s3 = inlined_call_operand.hbm [shape: f32[2,16], index: 3, kind: output, shape index: {}]
  %s4 = sld [smem:[#allocation0]]
  $region38: #{tpu_custom_call.1} parent=0
    _
  %s6 = ssub.s32 1, %s4
  %s7 = scalar_select 0, %s6, %s4
  $region1: #{tpu_custom_call.1} parent=0
    #allocation3 [shape = 'u8[8192]{0}', space=vmem, size = 0x2000, scoped, tag = 'input window, operand 0, single buffered']
    #allocation4 [shape = 's32[1]{0}', space=sflag, size = 0x4, scoped, tag = 'scoped memory for tpu_custom_call.1']
    #allocation5 [shape = 's32[1]{0}', space=sflag, size = 0x4, scoped, tag = 'scoped memory for tpu_custom_call.1']
    #allocation6 [shape = 'u8[16384]{0}', space=vmem, size = 0x4000, scoped, tag = 'input window, operand 1, single buffered']
    #allocation7 [shape = 's32[1]{0}', space=sflag, size = 0x4, scoped, tag = 'scoped memory for tpu_custom_call.1']
    #allocation8 [shape = 'u8[1024]{0}', space=vmem, size = 0x400, scoped, tag = 'output window, operand 0, single buffered']
    %8 = vsyncpa [#allocation4], 0
    %9 = vsyncpa [#allocation7], 0
    %10 = vsyncpa [#allocation5], 0
    // Predicated region
    $region2: #{tpu_custom_call.1} parent=1 // pred_check
      _
    $region3: #{tpu_custom_call.1} parent=1 // pred_check_branch
      %12 = sbr.rel (0) target = $region5
    $region4: #{tpu_custom_call.1} parent=1 // pred_region
      %s14 = ssub.s32 256, 256
      %15 = vsyncadd [#allocation4], %s14
      %s16 = sshll.u32 [#allocation3], 4
      %s17 = int_to_ptr.vmem [resolvable:$true] %s16
      %22 = dma.hbm_to_vmem [thread:$0]  %s0, 256, %s17, [#allocation4], 128, 128, 8
    $region5: #{tpu_custom_call.1} parent=1 // pred_fallthru
      _
    // Predicated region
    $region6: #{tpu_custom_call.1} parent=1 // pred_check
      _
    $region7: #{tpu_custom_call.1} parent=1 // pred_check_branch
      %24 = sbr.rel (0) target = $region9
    $region8: #{tpu_custom_call.1} parent=1 // pred_region
      %s26 = ssub.s32 512, 512
      %27 = vsyncadd [#allocation7], %s26
      %s28 = sshll.u32 [#allocation6], 4
      %s29 = int_to_ptr.vmem [resolvable:$true] %s28
      %34 = dma.hbm_to_vmem [thread:$0]  %s1, 512, %s29, [#allocation7], 128, 128, 8
    $region9: #{tpu_custom_call.1} parent=1 // pred_fallthru
      _
    // Predicated region
    $region10: #{tpu_custom_call.1} parent=1 // pred_check
      _
    $region11: #{tpu_custom_call.1} parent=1 // pred_check_branch
      %36 = sbr.rel (0) target = $region13
    $region12: #{tpu_custom_call.1} parent=1 // pred_region
      _
    $region13: #{tpu_custom_call.1} parent=1 // pred_fallthru
      _
    // Predicated region
    $region14: #{tpu_custom_call.1} parent=1 // pred_check
      _
    $region15: #{tpu_custom_call.1} parent=1 // pred_check_branch
      %38 = sbr.rel (0) target = $region17
    $region16: #{tpu_custom_call.1} parent=1 // pred_region
      %39 = dma.done [#allocation4], 256
    $region17: #{tpu_custom_call.1} parent=1 // pred_fallthru
      _
    // Predicated region
    $region18: #{tpu_custom_call.1} parent=1 // pred_check
      _
    $region19: #{tpu_custom_call.1} parent=1 // pred_check_branch
      %41 = sbr.rel (0) target = $region21
    $region20: #{tpu_custom_call.1} parent=1 // pred_region
      %42 = dma.done [#allocation7], 512
    $region21: #{tpu_custom_call.1} parent=1 // pred_fallthru
      _
    %p44 = scmp.eq.s32.totalorder 0, 0
    // Predicated region
    $region22: #{tpu_custom_call.1} parent=1 // pred_check
      %p45 = pneg %p44
    $region23: #{tpu_custom_call.1} parent=1 // pred_check_branch
      %47 = sbr.rel (%p45) target = $region25
    $region24: #{tpu_custom_call.1} parent=1 // pred_region
      %vm48 = vcmask 123904
      %49 = vst.msk [vmem:[#allocation2] sm:$0x3] %vm48, 0.0
    $region25: #{tpu_custom_call.1} parent=1 // pred_fallthru
      _
    %v50 = vld [vmem:[#allocation3] sm:$0x55]
    %v51 = vld [vmem:[#allocation3 + $0x8] sm:$0x55]
    %v52 = vld [vmem:[#allocation6] sm:$0xff]
    %v55 = vcombine.high %v50, %v50
    %v57 = vunpack.c.l.s4 1983009808
    %v58 = vunpack.c.0.s8 %v57
    %v59 = vlaneseq
    %v60 = vshrl.u32 %v59, 7
    %v61 = vsub.s32 %v58, %v60
    %v62 = vrot.slane %v50, %v61
    %v64 = vunpack.c.l.s4 1983009808
    %v65 = vunpack.c.0.s8 %v64
    %v66 = vlaneseq
    %v67 = vshrl.u32 %v66, 7
    %v68 = vsub.s32 %v65, %v67
    %v69 = vrot.slane %v55, %v68
    %v70 = vcombine.high %v62, %v62
    %v71 = vcombine.high %v69, %v69
    %v72 = vcombine.high %v51, %v51
    %v74 = vunpack.c.l.s4 1983009808
    %v75 = vunpack.c.0.s8 %v74
    %v76 = vlaneseq
    %v77 = vshrl.u32 %v76, 7
    %v78 = vsub.s32 %v75, %v77
    %v79 = vrot.slane %v51, %v78
    %v81 = vunpack.c.l.s4 1983009808
    %v82 = vunpack.c.0.s8 %v81
    %v83 = vlaneseq
    %v84 = vshrl.u32 %v83, 7
    %v85 = vsub.s32 %v82, %v84
    %v86 = vrot.slane %v72, %v85
    %v87 = vcombine.high %v79, %v79
    %v88 = vcombine.high %v86, %v86
    %v89 = vunpack.c.l.b16 %v62
    %v90 = vunpack.c.l.b16 %v70
    %v91 = vunpack.c.l.b16 %v69
    %v92 = vunpack.c.l.b16 %v71
    %v93 = vunpack.c.l.b16 %v79
    %v94 = vunpack.c.l.b16 %v87
    %v95 = vunpack.c.l.b16 %v86
    %v96 = vunpack.c.l.b16 %v88
    %v97 = vrot.slane %v93, 7
    %vm98 = vcmask 1041409
    %v99 = vsel %vm98, %v97, %v89
    %v100 = vrot.slane %v94, 7
    %v101 = vsel %vm98, %v100, %v90
    %v102 = vrot.slane %v95, 7
    %v103 = vsel %vm98, %v102, %v91
    %v104 = vrot.slane %v96, 7
    %v105 = vsel %vm98, %v104, %v92
    %v106 = vpack.c.b16 %v99, %v99
    %v107 = vpack.c.b16 %v101, %v101
    %v108 = vpack.c.b16 %v103, %v103
    %v109 = vpack.c.b16 %v105, %v105
    %v115 = vcombine.high %v52, %v52
    %v117 = vunpack.c.l.s4 1983009808
    %v118 = vunpack.c.0.s8 %v117
    %v119 = vlaneseq
    %v120 = vshrl.u32 %v119, 7
    %v121 = vsub.s32 %v118, %v120
    %v122 = vrot.slane %v52, %v121
    %v124 = vunpack.c.l.s4 1983009808
    %v125 = vunpack.c.0.s8 %v124
    %v126 = vlaneseq
    %v127 = vshrl.u32 %v126, 7
    %v128 = vsub.s32 %v125, %v127
    %v129 = vrot.slane %v115, %v128
    %v130 = vcombine.high %v122, %v122
    %v131 = vcombine.high %v129, %v129
    %136 = vmatprep.subr.bf16.mxu0 %v130
    %137 = vmatpush1.bf16.xpose.msra.mxu0 %v122
    %138 = vmatprep.subr.bf16.mxu0 0
    %139 = vmatpush1.bf16.xpose.msra.mxu0 0
    %140 = vmatprep.subr.bf16.mxu0 0
    %141 = vmatpush1.bf16.xpose.msra.mxu0 0
    %142 = vmatprep.subr.bf16.mxu0 0
    %143 = vmatpush1.bf16.xpose.msra.mxu0 0
    %144 = vmatprep.subr.bf16.mxu0 0
    %145 = vmatpush1.bf16.xpose.msra.mxu0 0
    %146 = vmatprep.subr.bf16.mxu0 0
    %147 = vmatpush1.bf16.xpose.msra.mxu0 0
    %148 = vmatprep.subr.bf16.mxu0 0
    %149 = vmatpush1.bf16.xpose.msra.mxu0 0
    %150 = vmatprep.subr.bf16.mxu0 0
    %151 = vmatpush1.bf16.xpose.msra.mxu0 0
    %152 = vmatprep.subr.bf16.mxu0 0
    %153 = vmatpush1.bf16.xpose.msra.mxu0 0
    %154 = vmatprep.subr.bf16.mxu0 0
    %155 = vmatpush1.bf16.xpose.msra.mxu0 0
    %156 = vmatprep.subr.bf16.mxu0 0
    %157 = vmatpush1.bf16.xpose.msra.mxu0 0
    %158 = vmatprep.subr.bf16.mxu0 0
    %159 = vmatpush1.bf16.xpose.msra.mxu0 0
    %160 = vmatprep.subr.bf16.mxu0 0
    %161 = vmatpush1.bf16.xpose.msra.mxu0 0
    %162 = vmatprep.subr.bf16.mxu0 0
    %163 = vmatpush1.bf16.xpose.msra.mxu0 0
    %164 = vmatprep.subr.bf16.mxu0 0
    %165 = vmatpush1.bf16.xpose.msra.mxu0 0
    %166 = vmatprep.subr.bf16.mxu0 0
    %167 = vmatpush1.bf16.xpose.msra.mxu0 0
    %168 = vmatprep.mubr.bf16.mxu0 %v107
    %169 = vmatmul.mubr.bf16.gmra.mrb[0].mxu0 %v106
    %v170 = vpop.f32.mrb[0].mxu0
    %v171 = vadd.f32 0.0, %v170
    %v172 = vpop.f32.mrb[0].mxu0
    %v173 = vpop.f32.mrb[0].mxu0
    %v174 = vpop.f32.mrb[0].mxu0
    %175 = vdwg.mxu0
    %176 = vmatprep.subr.bf16.mxu0 %v131
    %177 = vmatpush1.bf16.xpose.msra.mxu0 %v129
    %178 = vmatprep.subr.bf16.mxu0 0
    %179 = vmatpush1.bf16.xpose.msra.mxu0 0
    %180 = vmatprep.subr.bf16.mxu0 0
    %181 = vmatpush1.bf16.xpose.msra.mxu0 0
    %182 = vmatprep.subr.bf16.mxu0 0
    %183 = vmatpush1.bf16.xpose.msra.mxu0 0
    %184 = vmatprep.subr.bf16.mxu0 0
    %185 = vmatpush1.bf16.xpose.msra.mxu0 0
    %186 = vmatprep.subr.bf16.mxu0 0
    %187 = vmatpush1.bf16.xpose.msra.mxu0 0
    %188 = vmatprep.subr.bf16.mxu0 0
    %189 = vmatpush1.bf16.xpose.msra.mxu0 0
    %190 = vmatprep.subr.bf16.mxu0 0
    %191 = vmatpush1.bf16.xpose.msra.mxu0 0
    %192 = vmatprep.subr.bf16.mxu0 0
    %193 = vmatpush1.bf16.xpose.msra.mxu0 0
    %194 = vmatprep.subr.bf16.mxu0 0
    %195 = vmatpush1.bf16.xpose.msra.mxu0 0
    %196 = vmatprep.subr.bf16.mxu0 0
    %197 = vmatpush1.bf16.xpose.msra.mxu0 0
    %198 = vmatprep.subr.bf16.mxu0 0
    %199 = vmatpush1.bf16.xpose.msra.mxu0 0
    %200 = vmatprep.subr.bf16.mxu0 0
    %201 = vmatpush1.bf16.xpose.msra.mxu0 0
    %202 = vmatprep.subr.bf16.mxu0 0
    %203 = vmatpush1.bf16.xpose.msra.mxu0 0
    %204 = vmatprep.subr.bf16.mxu0 0
    %205 = vmatpush1.bf16.xpose.msra.mxu0 0
    %206 = vmatprep.subr.bf16.mxu0 0
    %207 = vmatpush1.bf16.xpose.msra.mxu0 0
    %208 = vmatprep.mubr.bf16.mxu0 %v109
    %209 = vmatmul.mubr.bf16.gmra.mrb[0].mxu0 %v108
    %v210 = vpop.f32.mrb[0].mxu0
    %v211 = vadd.f32 %v171, %v210
    %v212 = vpop.f32.mrb[0].mxu0
    %v213 = vpop.f32.mrb[0].mxu0
    %v214 = vpop.f32.mrb[0].mxu0
    %215 = vdwg.mxu0
    %v216 = vld [vmem:[#allocation2] sm:$0x3]
    %v217 = vadd.f32 %v216, %v211
    %vm218 = vcmask 25600
    %219 = vst.msk [vmem:[#allocation2] sm:$0x3] %vm218, %v217
    %v220 = vld [vmem:[#allocation3] sm:$0x55]
    %v221 = vld [vmem:[#allocation3 + $0x8] sm:$0x55]
    %s222 = scalar_lea.vmem [#allocation6], 8
    %v223 = vld [vmem:[%s222] sm:$0xff]
    %v226 = vcombine.high %v220, %v220
    %v228 = vunpack.c.l.s4 1983009808
    %v229 = vunpack.c.0.s8 %v228
    %v230 = vlaneseq
    %v231 = vshrl.u32 %v230, 7
    %v232 = vsub.s32 %v229, %v231
    %v233 = vrot.slane %v220, %v232
    %v235 = vunpack.c.l.s4 1983009808
    %v236 = vunpack.c.0.s8 %v235
    %v237 = vlaneseq
    %v238 = vshrl.u32 %v237, 7
    %v239 = vsub.s32 %v236, %v238
    %v240 = vrot.slane %v226, %v239
    %v241 = vcombine.high %v233, %v233
    %v242 = vcombine.high %v240, %v240
    %v243 = vcombine.high %v221, %v221
    %v245 = vunpack.c.l.s4 1983009808
    %v246 = vunpack.c.0.s8 %v245
    %v247 = vlaneseq
    %v248 = vshrl.u32 %v247, 7
    %v249 = vsub.s32 %v246, %v248
    %v250 = vrot.slane %v221, %v249
    %v252 = vunpack.c.l.s4 1983009808
    %v253 = vunpack.c.0.s8 %v252
    %v254 = vlaneseq
    %v255 = vshrl.u32 %v254, 7
    %v256 = vsub.s32 %v253, %v255
    %v257 = vrot.slane %v243, %v256
    %v258 = vcombine.high %v250, %v250
    %v259 = vcombine.high %v257, %v257
    %v260 = vunpack.c.l.b16 %v233
    %v261 = vunpack.c.l.b16 %v241
    %v262 = vunpack.c.l.b16 %v240
    %v263 = vunpack.c.l.b16 %v242
    %v264 = vunpack.c.l.b16 %v250
    %v265 = vunpack.c.l.b16 %v258
    %v266 = vunpack.c.l.b16 %v257
    %v267 = vunpack.c.l.b16 %v259
    %v268 = vrot.slane %v260, 1
    %v269 = vsel %vm98, %v264, %v268
    %v270 = vrot.slane %v261, 1
    %v271 = vsel %vm98, %v265, %v270
    %v272 = vrot.slane %v262, 1
    %v273 = vsel %vm98, %v266, %v272
    %v274 = vrot.slane %v263, 1
    %v275 = vsel %vm98, %v267, %v274
    %v276 = vpack.c.b16 %v269, %v269
    %v277 = vpack.c.b16 %v271, %v271
    %v278 = vpack.c.b16 %v273, %v273
    %v279 = vpack.c.b16 %v275, %v275
    %v285 = vcombine.high %v223, %v223
    %v287 = vunpack.c.l.s4 1983009808
    %v288 = vunpack.c.0.s8 %v287
    %v289 = vlaneseq
    %v290 = vshrl.u32 %v289, 7
    %v291 = vsub.s32 %v288, %v290
    %v292 = vrot.slane %v223, %v291
    %v294 = vunpack.c.l.s4 1983009808
    %v295 = vunpack.c.0.s8 %v294
    %v296 = vlaneseq
    %v297 = vshrl.u32 %v296, 7
    %v298 = vsub.s32 %v295, %v297
    %v299 = vrot.slane %v285, %v298
    %v300 = vcombine.high %v292, %v292
    %v301 = vcombine.high %v299, %v299
    %306 = vmatprep.subr.bf16.mxu0 %v300
    %307 = vmatpush1.bf16.xpose.msra.mxu0 %v292
    %308 = vmatprep.subr.bf16.mxu0 0
    %309 = vmatpush1.bf16.xpose.msra.mxu0 0
    %310 = vmatprep.subr.bf16.mxu0 0
    %311 = vmatpush1.bf16.xpose.msra.mxu0 0
    %312 = vmatprep.subr.bf16.mxu0 0
    %313 = vmatpush1.bf16.xpose.msra.mxu0 0
    %314 = vmatprep.subr.bf16.mxu0 0
    %315 = vmatpush1.bf16.xpose.msra.mxu0 0
    %316 = vmatprep.subr.bf16.mxu0 0
    %317 = vmatpush1.bf16.xpose.msra.mxu0 0
    %318 = vmatprep.subr.bf16.mxu0 0
    %319 = vmatpush1.bf16.xpose.msra.mxu0 0
    %320 = vmatprep.subr.bf16.mxu0 0
    %321 = vmatpush1.bf16.xpose.msra.mxu0 0
    %322 = vmatprep.subr.bf16.mxu0 0
    %323 = vmatpush1.bf16.xpose.msra.mxu0 0
    %324 = vmatprep.subr.bf16.mxu0 0
    %325 = vmatpush1.bf16.xpose.msra.mxu0 0
    %326 = vmatprep.subr.bf16.mxu0 0
    %327 = vmatpush1.bf16.xpose.msra.mxu0 0
    %328 = vmatprep.subr.bf16.mxu0 0
    %329 = vmatpush1.bf16.xpose.msra.mxu0 0
    %330 = vmatprep.subr.bf16.mxu0 0
    %331 = vmatpush1.bf16.xpose.msra.mxu0 0
    %332 = vmatprep.subr.bf16.mxu0 0
    %333 = vmatpush1.bf16.xpose.msra.mxu0 0
    %334 = vmatprep.subr.bf16.mxu0 0
    %335 = vmatpush1.bf16.xpose.msra.mxu0 0
    %336 = vmatprep.subr.bf16.mxu0 0
    %337 = vmatpush1.bf16.xpose.msra.mxu0 0
    %338 = vmatprep.mubr.bf16.mxu0 %v277
    %339 = vmatmul.mubr.bf16.gmra.mrb[0].mxu0 %v276
    %v340 = vpop.f32.mrb[0].mxu0
    %v341 = vadd.f32 0.0, %v340
    %v342 = vpop.f32.mrb[0].mxu0
    %v343 = vpop.f32.mrb[0].mxu0
    %v344 = vpop.f32.mrb[0].mxu0
    %345 = vdwg.mxu0
    %346 = vmatprep.subr.bf16.mxu0 %v301
    %347 = vmatpush1.bf16.xpose.msra.mxu0 %v299
    %348 = vmatprep.subr.bf16.mxu0 0
    %349 = vmatpush1.bf16.xpose.msra.mxu0 0
    %350 = vmatprep.subr.bf16.mxu0 0
    %351 = vmatpush1.bf16.xpose.msra.mxu0 0
    %352 = vmatprep.subr.bf16.mxu0 0
    %353 = vmatpush1.bf16.xpose.msra.mxu0 0
    %354 = vmatprep.subr.bf16.mxu0 0
    %355 = vmatpush1.bf16.xpose.msra.mxu0 0
    %356 = vmatprep.subr.bf16.mxu0 0
    %357 = vmatpush1.bf16.xpose.msra.mxu0 0
    %358 = vmatprep.subr.bf16.mxu0 0
    %359 = vmatpush1.bf16.xpose.msra.mxu0 0
    %360 = vmatprep.subr.bf16.mxu0 0
    %361 = vmatpush1.bf16.xpose.msra.mxu0 0
    %362 = vmatprep.subr.bf16.mxu0 0
    %363 = vmatpush1.bf16.xpose.msra.mxu0 0
    %364 = vmatprep.subr.bf16.mxu0 0
    %365 = vmatpush1.bf16.xpose.msra.mxu0 0
    %366 = vmatprep.subr.bf16.mxu0 0
    %367 = vmatpush1.bf16.xpose.msra.mxu0 0
    %368 = vmatprep.subr.bf16.mxu0 0
    %369 = vmatpush1.bf16.xpose.msra.mxu0 0
    %370 = vmatprep.subr.bf16.mxu0 0
    %371 = vmatpush1.bf16.xpose.msra.mxu0 0
    %372 = vmatprep.subr.bf16.mxu0 0
    %373 = vmatpush1.bf16.xpose.msra.mxu0 0
    %374 = vmatprep.subr.bf16.mxu0 0
    %375 = vmatpush1.bf16.xpose.msra.mxu0 0
    %376 = vmatprep.subr.bf16.mxu0 0
    %377 = vmatpush1.bf16.xpose.msra.mxu0 0
    %378 = vmatprep.mubr.bf16.mxu0 %v279
    %379 = vmatmul.mubr.bf16.gmra.mrb[0].mxu0 %v278
    %v380 = vpop.f32.mrb[0].mxu0
    %v381 = vadd.f32 %v341, %v380
    %v382 = vpop.f32.mrb[0].mxu0
    %v383 = vpop.f32.mrb[0].mxu0
    %v384 = vpop.f32.mrb[0].mxu0
    %385 = vdwg.mxu0
    %v386 = vld [vmem:[#allocation2] sm:$0x3]
    %388 = vrot.lane.b32.xlu0 %v381, 4
    %v389 = vpop.permute.xlu0 %388
    %v391 = vadd.f32 %v386, %v389
    %vm392 = vcmask 58400
    %393 = vst.msk [vmem:[#allocation2] sm:$0x3] %vm392, %v391
    %v394 = vld [vmem:[#allocation3] sm:$0xaa]
    %v395 = vld [vmem:[#allocation3 + $0x8] sm:$0xaa]
    %s396 = scalar_lea.vmem [#allocation6], 16
    %v397 = vld [vmem:[%s396] sm:$0xff]
    %v400 = vcombine.high %v394, %v394
    %v402 = vunpack.c.l.s4 1983009808
    %v403 = vunpack.c.0.s8 %v402
    %v404 = vlaneseq
    %v405 = vshrl.u32 %v404, 7
    %v406 = vsub.s32 %v403, %v405
    %v407 = vrot.slane %v394, %v406
    %v409 = vunpack.c.l.s4 1983009808
    %v410 = vunpack.c.0.s8 %v409
    %v411 = vlaneseq
    %v412 = vshrl.u32 %v411, 7
    %v413 = vsub.s32 %v410, %v412
    %v414 = vrot.slane %v400, %v413
    %v415 = vcombine.high %v407, %v407
    %v416 = vcombine.high %v414, %v414
    %v417 = vcombine.high %v395, %v395
    %v419 = vunpack.c.l.s4 1983009808
    %v420 = vunpack.c.0.s8 %v419
    %v421 = vlaneseq
    %v422 = vshrl.u32 %v421, 7
    %v423 = vsub.s32 %v420, %v422
    %v424 = vrot.slane %v395, %v423
    %v426 = vunpack.c.l.s4 1983009808
    %v427 = vunpack.c.0.s8 %v426
    %v428 = vlaneseq
    %v429 = vshrl.u32 %v428, 7
    %v430 = vsub.s32 %v427, %v429
    %v431 = vrot.slane %v417, %v430
    %v432 = vcombine.high %v424, %v424
    %v433 = vcombine.high %v431, %v431
    %v434 = vunpack.c.l.b16 %v407
    %v435 = vunpack.c.l.b16 %v415
    %v436 = vunpack.c.l.b16 %v414
    %v437 = vunpack.c.l.b16 %v416
    %v438 = vunpack.c.l.b16 %v424
    %v439 = vunpack.c.l.b16 %v432
    %v440 = vunpack.c.l.b16 %v431
    %v441 = vunpack.c.l.b16 %v433
    %v442 = vrot.slane %v434, 2
    %v443 = vrot.slane %v438, 1
    %v444 = vsel %vm98, %v443, %v442
    %v445 = vrot.slane %v435, 2
    %v446 = vrot.slane %v439, 1
    %v447 = vsel %vm98, %v446, %v445
    %v448 = vrot.slane %v436, 2
    %v449 = vrot.slane %v440, 1
    %v450 = vsel %vm98, %v449, %v448
    %v451 = vrot.slane %v437, 2
    %v452 = vrot.slane %v441, 1
    %v453 = vsel %vm98, %v452, %v451
    %v454 = vpack.c.b16 %v444, %v444
    %v455 = vpack.c.b16 %v447, %v447
    %v456 = vpack.c.b16 %v450, %v450
    %v457 = vpack.c.b16 %v453, %v453
    %v463 = vcombine.high %v397, %v397
    %v465 = vunpack.c.l.s4 1983009808
    %v466 = vunpack.c.0.s8 %v465
    %v467 = vlaneseq
    %v468 = vshrl.u32 %v467, 7
    %v469 = vsub.s32 %v466, %v468
    %v470 = vrot.slane %v397, %v469
    %v472 = vunpack.c.l.s4 1983009808
    %v473 = vunpack.c.0.s8 %v472
    %v474 = vlaneseq
    %v475 = vshrl.u32 %v474, 7
    %v476 = vsub.s32 %v473, %v475
    %v477 = vrot.slane %v463, %v476
    %v478 = vcombine.high %v470, %v470
    %v479 = vcombine.high %v477, %v477
    %484 = vmatprep.subr.bf16.mxu0 %v478
    %485 = vmatpush1.bf16.xpose.msra.mxu0 %v470
    %486 = vmatprep.subr.bf16.mxu0 0
    %487 = vmatpush1.bf16.xpose.msra.mxu0 0
    %488 = vmatprep.subr.bf16.mxu0 0
    %489 = vmatpush1.bf16.xpose.msra.mxu0 0
    %490 = vmatprep.subr.bf16.mxu0 0
    %491 = vmatpush1.bf16.xpose.msra.mxu0 0
    %492 = vmatprep.subr.bf16.mxu0 0
    %493 = vmatpush1.bf16.xpose.msra.mxu0 0
    %494 = vmatprep.subr.bf16.mxu0 0
    %495 = vmatpush1.bf16.xpose.msra.mxu0 0
    %496 = vmatprep.subr.bf16.mxu0 0
    %497 = vmatpush1.bf16.xpose.msra.mxu0 0
    %498 = vmatprep.subr.bf16.mxu0 0
    %499 = vmatpush1.bf16.xpose.msra.mxu0 0
    %500 = vmatprep.subr.bf16.mxu0 0
    %501 = vmatpush1.bf16.xpose.msra.mxu0 0
    %502 = vmatprep.subr.bf16.mxu0 0
    %503 = vmatpush1.bf16.xpose.msra.mxu0 0
    %504 = vmatprep.subr.bf16.mxu0 0
    %505 = vmatpush1.bf16.xpose.msra.mxu0 0
    %506 = vmatprep.subr.bf16.mxu0 0
    %507 = vmatpush1.bf16.xpose.msra.mxu0 0
    %508 = vmatprep.subr.bf16.mxu0 0
    %509 = vmatpush1.bf16.xpose.msra.mxu0 0
    %510 = vmatprep.subr.bf16.mxu0 0
    %511 = vmatpush1.bf16.xpose.msra.mxu0 0
    %512 = vmatprep.subr.bf16.mxu0 0
    %513 = vmatpush1.bf16.xpose.msra.mxu0 0
    %514 = vmatprep.subr.bf16.mxu0 0
    %515 = vmatpush1.bf16.xpose.msra.mxu0 0
    %516 = vmatprep.mubr.bf16.mxu0 %v455
    %517 = vmatmul.mubr.bf16.gmra.mrb[0].mxu0 %v454
    %v518 = vpop.f32.mrb[0].mxu0
    %v519 = vadd.f32 0.0, %v518
    %v520 = vpop.f32.mrb[0].mxu0
    %v521 = vpop.f32.mrb[0].mxu0
    %v522 = vpop.f32.mrb[0].mxu0
    %523 = vdwg.mxu0
    %524 = vmatprep.subr.bf16.mxu0 %v479
    %525 = vmatpush1.bf16.xpose.msra.mxu0 %v477
    %526 = vmatprep.subr.bf16.mxu0 0
    %527 = vmatpush1.bf16.xpose.msra.mxu0 0
    %528 = vmatprep.subr.bf16.mxu0 0
    %529 = vmatpush1.bf16.xpose.msra.mxu0 0
    %530 = vmatprep.subr.bf16.mxu0 0
    %531 = vmatpush1.bf16.xpose.msra.mxu0 0
    %532 = vmatprep.subr.bf16.mxu0 0
    %533 = vmatpush1.bf16.xpose.msra.mxu0 0
    %534 = vmatprep.subr.bf16.mxu0 0
    %535 = vmatpush1.bf16.xpose.msra.mxu0 0
    %536 = vmatprep.subr.bf16.mxu0 0
    %537 = vmatpush1.bf16.xpose.msra.mxu0 0
    %538 = vmatprep.subr.bf16.mxu0 0
    %539 = vmatpush1.bf16.xpose.msra.mxu0 0
    %540 = vmatprep.subr.bf16.mxu0 0
    %541 = vmatpush1.bf16.xpose.msra.mxu0 0
    %542 = vmatprep.subr.bf16.mxu0 0
    %543 = vmatpush1.bf16.xpose.msra.mxu0 0
    %544 = vmatprep.subr.bf16.mxu0 0
    %545 = vmatpush1.bf16.xpose.msra.mxu0 0
    %546 = vmatprep.subr.bf16.mxu0 0
    %547 = vmatpush1.bf16.xpose.msra.mxu0 0
    %548 = vmatprep.subr.bf16.mxu0 0
    %549 = vmatpush1.bf16.xpose.msra.mxu0 0
    %550 = vmatprep.subr.bf16.mxu0 0
    %551 = vmatpush1.bf16.xpose.msra.mxu0 0
    %552 = vmatprep.subr.bf16.mxu0 0
    %553 = vmatpush1.bf16.xpose.msra.mxu0 0
    %554 = vmatprep.subr.bf16.mxu0 0
    %555 = vmatpush1.bf16.xpose.msra.mxu0 0
    %556 = vmatprep.mubr.bf16.mxu0 %v457
    %557 = vmatmul.mubr.bf16.gmra.mrb[0].mxu0 %v456
    %v558 = vpop.f32.mrb[0].mxu0
    %v559 = vadd.f32 %v519, %v558
    %v560 = vpop.f32.mrb[0].mxu0
    %v561 = vpop.f32.mrb[0].mxu0
    %v562 = vpop.f32.mrb[0].mxu0
    %563 = vdwg.mxu0
    %v564 = vld [vmem:[#allocation2] sm:$0x3]
    %566 = vrot.lane.b32.xlu0 %v559, 8
    %v567 = vpop.permute.xlu0 %566
    %v569 = vadd.f32 %v564, %v567
    %vm570 = vcmask 91200
    %571 = vst.msk [vmem:[#allocation2] sm:$0x3] %vm570, %v569
    %v572 = vld [vmem:[#allocation3] sm:$0xaa]
    %v573 = vld [vmem:[#allocation3 + $0x8] sm:$0xaa]
    %s574 = scalar_lea.vmem [#allocation6], 24
    %v575 = vld [vmem:[%s574] sm:$0xff]
    %v578 = vcombine.high %v572, %v572
    %v580 = vunpack.c.l.s4 1983009808
    %v581 = vunpack.c.0.s8 %v580
    %v582 = vlaneseq
    %v583 = vshrl.u32 %v582, 7
    %v584 = vsub.s32 %v581, %v583
    %v585 = vrot.slane %v572, %v584
    %v587 = vunpack.c.l.s4 1983009808
    %v588 = vunpack.c.0.s8 %v587
    %v589 = vlaneseq
    %v590 = vshrl.u32 %v589, 7
    %v591 = vsub.s32 %v588, %v590
    %v592 = vrot.slane %v578, %v591
    %v593 = vcombine.high %v585, %v585
    %v594 = vcombine.high %v592, %v592
    %v595 = vcombine.high %v573, %v573
    %v597 = vunpack.c.l.s4 1983009808
    %v598 = vunpack.c.0.s8 %v597
    %v599 = vlaneseq
    %v600 = vshrl.u32 %v599, 7
    %v601 = vsub.s32 %v598, %v600
    %v602 = vrot.slane %v573, %v601
    %v604 = vunpack.c.l.s4 1983009808
    %v605 = vunpack.c.0.s8 %v604
    %v606 = vlaneseq
    %v607 = vshrl.u32 %v606, 7
    %v608 = vsub.s32 %v605, %v607
    %v609 = vrot.slane %v595, %v608
    %v610 = vcombine.high %v602, %v602
    %v611 = vcombine.high %v609, %v609
    %v612 = vunpack.c.l.b16 %v585
    %v613 = vunpack.c.l.b16 %v593
    %v614 = vunpack.c.l.b16 %v592
    %v615 = vunpack.c.l.b16 %v594
    %v616 = vunpack.c.l.b16 %v602
    %v617 = vunpack.c.l.b16 %v610
    %v618 = vunpack.c.l.b16 %v609
    %v619 = vunpack.c.l.b16 %v611
    %v620 = vrot.slane %v612, 3
    %v621 = vrot.slane %v616, 2
    %v622 = vsel %vm98, %v621, %v620
    %v623 = vrot.slane %v613, 3
    %v624 = vrot.slane %v617, 2
    %v625 = vsel %vm98, %v624, %v623
    %v626 = vrot.slane %v614, 3
    %v627 = vrot.slane %v618, 2
    %v628 = vsel %vm98, %v627, %v626
    %v629 = vrot.slane %v615, 3
    %v630 = vrot.slane %v619, 2
    %v631 = vsel %vm98, %v630, %v629
    %v632 = vpack.c.b16 %v622, %v622
    %v633 = vpack.c.b16 %v625, %v625
    %v634 = vpack.c.b16 %v628, %v628
    %v635 = vpack.c.b16 %v631, %v631
    %v641 = vcombine.high %v575, %v575
    %v643 = vunpack.c.l.s4 1983009808
    %v644 = vunpack.c.0.s8 %v643
    %v645 = vlaneseq
    %v646 = vshrl.u32 %v645, 7
    %v647 = vsub.s32 %v644, %v646
    %v648 = vrot.slane %v575, %v647
    %v650 = vunpack.c.l.s4 1983009808
    %v651 = vunpack.c.0.s8 %v650
    %v652 = vlaneseq
    %v653 = vshrl.u32 %v652, 7
    %v654 = vsub.s32 %v651, %v653
    %v655 = vrot.slane %v641, %v654
    %v656 = vcombine.high %v648, %v648
    %v657 = vcombine.high %v655, %v655
    %662 = vmatprep.subr.bf16.mxu0 %v656
    %663 = vmatpush1.bf16.xpose.msra.mxu0 %v648
    %664 = vmatprep.subr.bf16.mxu0 0
    %665 = vmatpush1.bf16.xpose.msra.mxu0 0
    %666 = vmatprep.subr.bf16.mxu0 0
    %667 = vmatpush1.bf16.xpose.msra.mxu0 0
    %668 = vmatprep.subr.bf16.mxu0 0
    %669 = vmatpush1.bf16.xpose.msra.mxu0 0
    %670 = vmatprep.subr.bf16.mxu0 0
    %671 = vmatpush1.bf16.xpose.msra.mxu0 0
    %672 = vmatprep.subr.bf16.mxu0 0
    %673 = vmatpush1.bf16.xpose.msra.mxu0 0
    %674 = vmatprep.subr.bf16.mxu0 0
    %675 = vmatpush1.bf16.xpose.msra.mxu0 0
    %676 = vmatprep.subr.bf16.mxu0 0
    %677 = vmatpush1.bf16.xpose.msra.mxu0 0
    %678 = vmatprep.subr.bf16.mxu0 0
    %679 = vmatpush1.bf16.xpose.msra.mxu0 0
    %680 = vmatprep.subr.bf16.mxu0 0
    %681 = vmatpush1.bf16.xpose.msra.mxu0 0
    %682 = vmatprep.subr.bf16.mxu0 0
    %683 = vmatpush1.bf16.xpose.msra.mxu0 0
    %684 = vmatprep.subr.bf16.mxu0 0
    %685 = vmatpush1.bf16.xpose.msra.mxu0 0
    %686 = vmatprep.subr.bf16.mxu0 0
    %687 = vmatpush1.bf16.xpose.msra.mxu0 0
    %688 = vmatprep.subr.bf16.mxu0 0
    %689 = vmatpush1.bf16.xpose.msra.mxu0 0
    %690 = vmatprep.subr.bf16.mxu0 0
    %691 = vmatpush1.bf16.xpose.msra.mxu0 0
    %692 = vmatprep.subr.bf16.mxu0 0
    %693 = vmatpush1.bf16.xpose.msra.mxu0 0
    %694 = vmatprep.mubr.bf16.mxu0 %v633
    %695 = vmatmul.mubr.bf16.gmra.mrb[0].mxu0 %v632
    %v696 = vpop.f32.mrb[0].mxu0
    %v697 = vadd.f32 0.0, %v696
    %v698 = vpop.f32.mrb[0].mxu0
    %v699 = vpop.f32.mrb[0].mxu0
    %v700 = vpop.f32.mrb[0].mxu0
    %701 = vdwg.mxu0
    %702 = vmatprep.subr.bf16.mxu0 %v657
    %703 = vmatpush1.bf16.xpose.msra.mxu0 %v655
    %704 = vmatprep.subr.bf16.mxu0 0
    %705 = vmatpush1.bf16.xpose.msra.mxu0 0
    %706 = vmatprep.subr.bf16.mxu0 0
    %707 = vmatpush1.bf16.xpose.msra.mxu0 0
    %708 = vmatprep.subr.bf16.mxu0 0
    %709 = vmatpush1.bf16.xpose.msra.mxu0 0
    %710 = vmatprep.subr.bf16.mxu0 0
    %711 = vmatpush1.bf16.xpose.msra.mxu0 0
    %712 = vmatprep.subr.bf16.mxu0 0
    %713 = vmatpush1.bf16.xpose.msra.mxu0 0
    %714 = vmatprep.subr.bf16.mxu0 0
    %715 = vmatpush1.bf16.xpose.msra.mxu0 0
    %716 = vmatprep.subr.bf16.mxu0 0
    %717 = vmatpush1.bf16.xpose.msra.mxu0 0
    %718 = vmatprep.subr.bf16.mxu0 0
    %719 = vmatpush1.bf16.xpose.msra.mxu0 0
    %720 = vmatprep.subr.bf16.mxu0 0
    %721 = vmatpush1.bf16.xpose.msra.mxu0 0
    %722 = vmatprep.subr.bf16.mxu0 0
    %723 = vmatpush1.bf16.xpose.msra.mxu0 0
    %724 = vmatprep.subr.bf16.mxu0 0
    %725 = vmatpush1.bf16.xpose.msra.mxu0 0
    %726 = vmatprep.subr.bf16.mxu0 0
    %727 = vmatpush1.bf16.xpose.msra.mxu0 0
    %728 = vmatprep.subr.bf16.mxu0 0
    %729 = vmatpush1.bf16.xpose.msra.mxu0 0
    %730 = vmatprep.subr.bf16.mxu0 0
    %731 = vmatpush1.bf16.xpose.msra.mxu0 0
    %732 = vmatprep.subr.bf16.mxu0 0
    %733 = vmatpush1.bf16.xpose.msra.mxu0 0
    %734 = vmatprep.mubr.bf16.mxu0 %v635
    %735 = vmatmul.mubr.bf16.gmra.mrb[0].mxu0 %v634
    %v736 = vpop.f32.mrb[0].mxu0
    %v737 = vadd.f32 %v697, %v736
    %v738 = vpop.f32.mrb[0].mxu0
    %v739 = vpop.f32.mrb[0].mxu0
    %v740 = vpop.f32.mrb[0].mxu0
    %741 = vdwg.mxu0
    %v742 = vld [vmem:[#allocation2] sm:$0x3]
    %744 = vrot.lane.b32.xlu0 %v737, 12
    %v745 = vpop.permute.xlu0 %744
    %v747 = vadd.f32 %v742, %v745
    %vm748 = vcmask 124000
    %749 = vst.msk [vmem:[#allocation2] sm:$0x3] %vm748, %v747
    // Predicated region
    $region26: #{tpu_custom_call.1} parent=1 // pred_check
      %p750 = pneg %p44
    $region27: #{tpu_custom_call.1} parent=1 // pred_check_branch
      %752 = sbr.rel (%p750) target = $region29
    $region28: #{tpu_custom_call.1} parent=1 // pred_region
      %v753 = vld [vmem:[#allocation2] sm:$0x3]
      %v754 = vld [vmem:[%s2] sm:$0x1]
      %v756 = vlaneseq
      %v757 = vshrl.u32 %v756, 7
      %v758 = vsub.s32 0, %v757
      %v759 = vrot.slane %v754, %v758
      %v761 = vadd.f32 %v753, %v759
      %vm762 = vcmask 123904
      %763 = vst.msk [vmem:[#allocation8] sm:$0x3] %vm762, %v761
    $region29: #{tpu_custom_call.1} parent=1 // pred_fallthru
      _
    // Predicated region
    $region30: #{tpu_custom_call.1} parent=1 // pred_check
      _
    $region31: #{tpu_custom_call.1} parent=1 // pred_check_branch
      %765 = sbr.rel (0) target = $region33
    $region32: #{tpu_custom_call.1} parent=1 // pred_region
      %s767 = ssub.s32 32, 32
      %768 = vsyncadd [#allocation5], %s767
      %s770 = sshll.u32 [#allocation8], 4
      %s771 = int_to_ptr.vmem [resolvable:$true] %s770
      %773 = dma.vmem_to_hbm [thread:$0]  %s771, 32, %s3, [#allocation5]
    $region33: #{tpu_custom_call.1} parent=1 // pred_fallthru
      _
    // Predicated region
    $region34: #{tpu_custom_call.1} parent=1 // pred_check
      _
    $region35: #{tpu_custom_call.1} parent=1 // pred_check_branch
      %775 = sbr.rel (0) target = $region37
    $region36: #{tpu_custom_call.1} parent=1 // pred_region
      %776 = dma.done [#allocation5], 32
    $region37: #{tpu_custom_call.1} parent=1 // pred_fallthru
      _
    %777 = vsyncpa [#allocation4], 1
    %778 = vsyncpa [#allocation7], 1
    %779 = vsyncpa [#allocation5], 1

</llo_original>
